<compile_context>
chip_gen: v7x
topology: tpu7x:2x2x1
jax: 0.10.0
libtpu: 0.0.40
codegen_flags: <defaults>
</compile_context>

<pallas_src>
import jax
import jax.numpy as jnp
from jax.experimental import pallas as pl
from jax.experimental.pallas import tpu as pltpu


# ----------------------------------------------------------------------------- kernel
def _rlinear_kernel(x_ref, w_ref, b_ref, o_ref):
    # x_ref : (S, TN) f32 — TN lane columns (fused batch*channel, or a channel tile)
    # w_ref : (P, S)  f32 — nn.Linear(seq_len, pred_len).weight (VMEM-resident)
    # b_ref : (P, 1)  f32 — bias, broadcast over columns
    # o_ref : (P, TN) f32
    x = x_ref[...]                                    # [S, TN]
    s = x.shape[0]

    mean = jnp.mean(x, axis=0, keepdims=True)         # [1, TN]
    xc = x - mean                                     # centered; reused below
    # torch.var default is unbiased (ddof=1), matching the PyTorch module.
    var = jnp.sum(xc * xc, axis=0, keepdims=True) * (1.0 / (s - 1))
    stdev = jnp.sqrt(var + 1e-5)                      # [1, TN]

    # normalize/de-normalize cancel:  W @ (xc/std) * std + b*std + mean
    #                              == W @ xc             + b*std + mean
    pred = jnp.dot(w_ref[...], xc, preferred_element_type=jnp.float32)  # [P, TN] (MXU)
    o_ref[...] = pred + b_ref[...] * stdev + mean     # single fused store


# ----------------------------------------------------------------------------- tiling
_VMEM_BUDGET = 24 << 20   # target per-tile working set; fits 64 MiB/TC (v7x) comfortably
_VMEM_LIMIT = 36 << 20    # scoped VMEM limit handed to Mosaic (safe on v5e/v6e/v7x)


def _bytes_per_lane(s, p):
    # f32 working set per lane column: double-buffered input/output tiles
    # (2*(S+P)), centered copy + elementwise temps (~3*S), matmul/result temps (~2*P).
    return 4 * (2 * (s + p) + 3 * s + 2 * p)


def _fused_lane_tiling(n, s, p):
    """Pick (TN, N_pad) for the fused [S, B*C] layout."""
    n_chunks = -(-n // 128)                                        # 128-lane chunks
    budget_chunks = max(1, _VMEM_BUDGET // (_bytes_per_lane(s, p) * 128))
    # Grid steps: enough to respect the VMEM budget, and >= 2 when possible so the
    # parallel grid axis can be sharded across v7x's two TensorCores.
    steps = max(min(2, n_chunks), -(-n_chunks // budget_chunks))
    cpb = -(-n_chunks // steps)                                    # chunks per block
    tn = cpb * 128
    n_pad = (-(-n_chunks // cpb)) * tn                             # near-minimal padding
    return tn, n_pad


def _divisor_chunk_tile(c_chunks, s, p, batch):
    """Largest divisor of c_chunks (in 128-lane chunks) fitting the VMEM budget."""
    budget_chunks = max(1, _VMEM_BUDGET // (_bytes_per_lane(s, p) * 128))
    # If batch == 1, keep >= 2 channel tiles (when possible) for the v7x megacore.
    cap = budget_chunks if batch > 1 else max(1, -(-c_chunks // 2))
    cap = max(1, min(cap, c_chunks))
    for d in range(cap, 0, -1):
        if c_chunks % d == 0:
            return d
    return 1


# ----------------------------------------------------------------------------- wrapper
def rlinear_forward(x_enc, weight, bias):
    """x_enc: [B, S, C]; weight: [P, S]; bias: [P] -> [B, P, C]."""
    B, S, C = x_enc.shape
    P = weight.shape[0]
    if S < 2:
        # torch.var(ddof=1) is NaN for a single time step; guard explicitly.
        raise ValueError("rlinear_forward requires seq_len >= 2")

    x_enc = x_enc.astype(jnp.float32)
    w = weight.astype(jnp.float32)
    bias2d = bias.reshape(P, 1).astype(jnp.float32)

    if C % 128 == 0:
        # ---- Direct path: tile the original [B, S, C]; no wrapper transposes
        # (saves two full HBM passes on a memory-bound kernel).
        c_chunks = C // 128
        tc = _divisor_chunk_tile(c_chunks, S, P, B) * 128
        return pl.pallas_call(
            _rlinear_kernel,
            out_shape=jax.ShapeDtypeStruct((B, P, C), jnp.float32),
            grid_spec=pltpu.PrefetchScalarGridSpec(
                num_scalar_prefetch=0,
                grid=(B, C // tc),
                in_specs=[
                    pl.BlockSpec((None, S, tc), lambda b, j: (b, 0, j)),  # x tile (squeezed batch)
                    pl.BlockSpec((P, S), lambda b, j: (0, 0)),            # W resident
                    pl.BlockSpec((P, 1), lambda b, j: (0, 0)),            # bias resident
                ],
                out_specs=pl.BlockSpec((None, P, tc), lambda b, j: (b, 0, j)),
            ),
            compiler_params=pltpu.CompilerParams(
                dimension_semantics=("parallel", "parallel"),
                vmem_limit_bytes=_VMEM_LIMIT),
        )(x_enc, w, bias2d)

    # ---- Fused-lane path (small / non-lane-aligned C): [B,S,C] -> [S, B*C]
    N = B * C
    tn, n_pad = _fused_lane_tiling(N, S, P)
    x2d = jnp.transpose(x_enc, (1, 0, 2)).reshape(S, N)
    if n_pad != N:
        x2d = jnp.pad(x2d, ((0, 0), (0, n_pad - N)))   # zero columns are benign

    out2d = pl.pallas_call(
        _rlinear_kernel,
        out_shape=jax.ShapeDtypeStruct((P, n_pad), jnp.float32),
        grid_spec=pltpu.PrefetchScalarGridSpec(
            num_scalar_prefetch=0,
            grid=(n_pad // tn,),                        # lane tiles (parallel)
            in_specs=[
                pl.BlockSpec((S, tn), lambda j: (0, j)),     # x columns tile
                pl.BlockSpec((P, S), lambda j: (0, 0)),      # W resident
                pl.BlockSpec((P, 1), lambda j: (0, 0)),      # bias resident
            ],
            out_specs=pl.BlockSpec((P, tn), lambda j: (0, j)),
        ),
        compiler_params=pltpu.CompilerParams(
            dimension_semantics=("parallel",),
            vmem_limit_bytes=_VMEM_LIMIT),
    )(x2d, w, bias2d)

    out = out2d[:, :N].reshape(P, B, C)                 # [P, B, C]
    return jnp.transpose(out, (1, 0, 2))                # [B, P, C]


# ----------------------------------------------------------------------------- reference
def rlinear_reference(x_enc, weight, bias):
    """Pure-JAX reference mirroring the PyTorch encoder()."""
    mean = jnp.mean(x_enc, axis=1, keepdims=True)
    var = jnp.var(x_enc, axis=1, keepdims=True, ddof=1)
    stdev = jnp.sqrt(var + 1e-5)
    xn = (x_enc - mean) / stdev
    # nn.Linear on x.transpose(1,2): [B, C, S] @ W.T + b, transposed back -> [B, P, C]
    pred = jnp.einsum("bsc,ps->bpc", xn, weight) + bias[None, :, None]
    return pred * stdev + mean


# ----------------------------------------------------------------------------- test
if __name__ == "__main__":
    key = jax.random.PRNGKey(0)
    kx, kw, kb, kx2 = jax.random.split(key, 4)

    # Forecast-path shapes (small): batch=2, seq_len=16, enc_in=8, pred_len=24.
    B, S, C, P = 2, 16, 8, 24
    x_enc = jax.random.normal(kx, (B, S, C), dtype=jnp.float32)
    # deterministic synthetic parameters; shapes match nn.Linear(seq_len, pred_len)
    weight = jax.random.normal(kw, (P, S), dtype=jnp.float32) * (1.0 / jnp.sqrt(S))
    bias = jax.random.normal(kb, (P,), dtype=jnp.float32) * 0.01

    # Fused-lane path (C not lane-aligned).
    out = jax.block_until_ready(rlinear_forward(x_enc, weight, bias))
    ref = rlinear_reference(x_enc, weight, bias)
    assert out.shape == (B, P, C)
    assert jnp.allclose(out, ref, atol=1e-4, rtol=1e-4), "mismatch vs reference (fused path)"

    # Lane-aligned channel count exercises the transpose-free direct path.
    C2 = 128
    x_enc2 = jax.random.normal(kx2, (B, S, C2), dtype=jnp.float32)
    out2 = jax.block_until_ready(rlinear_forward(x_enc2, weight, bias))
    ref2 = rlinear_reference(x_enc2, weight, bias)
    assert out2.shape == (B, P, C2)
    assert jnp.allclose(out2, ref2, atol=1e-4, rtol=1e-4), "mismatch vs reference (direct path)"

    # forward() returns dec_out[:, -pred_len:, :], which is the full [B, P, C] output here.
    # TODO(synk): classification-task projection head (nn.Linear(enc_in*seq_len, num_class))
    # is outside the forecast forward path and is not implemented here.
    print("KERNEL_OK")
</pallas_src>

<mosaic_0001>
module attributes {stable_mosaic.version = 11 : i64} {
  func.func @_rlinear_kernel(%arg0: i32, %arg1: memref<16x128xf32, #tpu.memory_space<vmem>>, %arg2: memref<24x16xf32, #tpu.memory_space<vmem>>, %arg3: memref<24x1xf32, #tpu.memory_space<vmem>>, %arg4: memref<24x128xf32, #tpu.memory_space<vmem>>) attributes {dimension_semantics = [#tpu.dimension_semantics<parallel>], iteration_bounds = array<i64: 1>, scalar_prefetch = 0 : i64, scratch_operands = 0 : i64, tpu.core_type = #tpu.core_type<tc>, window_params = [{transform_indices = @transform_0, window_bounds = array<i64: 16, 128>}, {pipeline_mode = #tpu.pipeline_mode<synchronous>, transform_indices = @transform_1, window_bounds = array<i64: 24, 16>}, {pipeline_mode = #tpu.pipeline_mode<synchronous>, transform_indices = @transform_2, window_bounds = array<i64: 24, 1>}, {transform_indices = @transform_3, window_bounds = array<i64: 24, 128>}]} {
    %c0 = arith.constant 0 : index
    %c0_0 = arith.constant 0 : index
    %0 = vector.load %arg1[%c0, %c0_0] : memref<16x128xf32, #tpu.memory_space<vmem>>, vector<16x128xf32>
    %cst = arith.constant dense<0.000000e+00> : vector<128xf32>
    %1 = vector.multi_reduction <add>, %0, %cst [0] : vector<16x128xf32> to vector<128xf32>
    %2 = vector.shape_cast %1 : vector<128xf32> to vector<1x128xf32>
    %cst_1 = arith.constant 1.600000e+01 : f32
    %3 = vector.broadcast %cst_1 : f32 to vector<1x128xf32>
    %4 = arith.divf %2, %3 : vector<1x128xf32>
    %5 = vector.broadcast %4 : vector<1x128xf32> to vector<16x128xf32>
    %6 = arith.subf %0, %5 : vector<16x128xf32>
    %7 = arith.mulf %6, %6 : vector<16x128xf32>
    %cst_2 = arith.constant dense<0.000000e+00> : vector<128xf32>
    %8 = vector.multi_reduction <add>, %7, %cst_2 [0] : vector<16x128xf32> to vector<128xf32>
    %9 = vector.shape_cast %8 : vector<128xf32> to vector<1x128xf32>
    %cst_3 = arith.constant 0.0666666701 : f32
    %10 = vector.broadcast %cst_3 : f32 to vector<1x128xf32>
    %11 = arith.mulf %9, %10 : vector<1x128xf32>
    %cst_4 = arith.constant 9.99999974E-6 : f32
    %12 = vector.broadcast %cst_4 : f32 to vector<1x128xf32>
    %13 = arith.addf %11, %12 : vector<1x128xf32>
    %14 = math.sqrt %13 : vector<1x128xf32>
    %c0_5 = arith.constant 0 : index
    %c0_6 = arith.constant 0 : index
    %15 = vector.load %arg2[%c0_5, %c0_6] : memref<24x16xf32, #tpu.memory_space<vmem>>, vector<24x16xf32>
    %cst_7 = arith.constant dense<0.000000e+00> : vector<24x128xf32>
    %16 = tpu.matmul %15, %6, %cst_7 {dimension_numbers = #tpu.dot_dimension_numbers<[1], [0], [0], [1], [0, 0, 1, 1], [], []>} : vector<24x16xf32>, vector<16x128xf32>, vector<24x128xf32> -> vector<24x128xf32>
    %c0_8 = arith.constant 0 : index
    %c0_9 = arith.constant 0 : index
    %17 = vector.load %arg3[%c0_8, %c0_9] : memref<24x1xf32, #tpu.memory_space<vmem>>, vector<24x1xf32>
    %18 = vector.broadcast %17 : vector<24x1xf32> to vector<24x128xf32>
    %19 = vector.broadcast %14 : vector<1x128xf32> to vector<24x128xf32>
    %20 = arith.mulf %18, %19 : vector<24x128xf32>
    %21 = arith.addf %16, %20 : vector<24x128xf32>
    %22 = vector.broadcast %4 : vector<1x128xf32> to vector<24x128xf32>
    %23 = arith.addf %21, %22 : vector<24x128xf32>
    %c0_10 = arith.constant 0 : index
    %c0_11 = arith.constant 0 : index
    %24 = vector.load %arg4[%c0_10, %c0_11] : memref<24x128xf32, #tpu.memory_space<vmem>>, vector<24x128xf32>
    tpu.vector_store %arg4[%c0_10, %c0_11], %23 {strides = array<i32>} : memref<24x128xf32, #tpu.memory_space<vmem>>, vector<24x128xf32>,
    return
  }
  func.func @transform_0(%arg0: i32) -> (i32, i32) {
    %c0_i32 = arith.constant 0 : i32
    %c0_i32_0 = arith.constant 0 : i32
    return %c0_i32, %arg0 : i32, i32
  }
  func.func @transform_1(%arg0: i32) -> (i32, i32) {
    %c0_i32 = arith.constant 0 : i32
    %c0_i32_0 = arith.constant 0 : i32
    %c0_i32_1 = arith.constant 0 : i32
    return %c0_i32, %c0_i32_0 : i32, i32
  }
  func.func @transform_2(%arg0: i32) -> (i32, i32) {
    %c0_i32 = arith.constant 0 : i32
    %c0_i32_0 = arith.constant 0 : i32
    %c0_i32_1 = arith.constant 0 : i32
    return %c0_i32, %c0_i32_0 : i32, i32
  }
  func.func @transform_3(%arg0: i32) -> (i32, i32) {
    %c0_i32 = arith.constant 0 : i32
    %c0_i32_0 = arith.constant 0 : i32
    return %c0_i32, %arg0 : i32, i32
  }
}

</mosaic_0001>

<llo_original>
// kernel: tpu_custom_call.1
$region0: #{tpu_custom_call.1}
  #allocation0 [shape = 'u32[]', space=smem, size = 0x4, offset = 0x4, fixed_abs, tag = 'smem constant byte address 0x4 - core index']
  #allocation1 [shape = 'u32[144,128]{1,0:T(1,128)}', space=vmem, size = 0x12000, scoped, tag = 'internal scratch']
  %s0 = inlined_call_operand.vmem [shape: f32[16,128], index: 0, kind: input, shape index: {}]
  %s1 = inlined_call_operand.vmem [shape: f32[24,16], index: 1, kind: input, shape index: {}]
  %s2 = inlined_call_operand.vmem [shape: f32[24,1], index: 2, kind: input, shape index: {}]
  %s3 = inlined_call_operand.hbm [shape: f32[24,128], index: 3, kind: output, shape index: {}]
  %s4 = sld [smem:[#allocation0]]
  $region22: #{tpu_custom_call.1} parent=0
    _
  %s6 = ssub.s32 1, %s4
  %s7 = scalar_select 0, %s6, %s4
  $region1: #{tpu_custom_call.1} parent=0
    #allocation2 [shape = 'u8[12288]{0}', space=vmem, size = 0x3000, scoped, tag = 'output window, operand 0, single buffered']
    #allocation3 [shape = 's32[1]{0}', space=sflag, size = 0x4, scoped, tag = 'scoped memory for tpu_custom_call.1']
    %8 = vsyncpa [#allocation3], 0
    // Predicated region
    $region2: #{tpu_custom_call.1} parent=1 // pred_check
      _
    $region3: #{tpu_custom_call.1} parent=1 // pred_check_branch
      %10 = sbr.rel (0) target = $region5
    $region4: #{tpu_custom_call.1} parent=1 // pred_region
      _
    $region5: #{tpu_custom_call.1} parent=1 // pred_fallthru
      _
    // Predicated region
    $region6: #{tpu_custom_call.1} parent=1 // pred_check
      _
    $region7: #{tpu_custom_call.1} parent=1 // pred_check_branch
      %12 = sbr.rel (0) target = $region9
    $region8: #{tpu_custom_call.1} parent=1 // pred_region
      _
    $region9: #{tpu_custom_call.1} parent=1 // pred_fallthru
      _
    // Predicated region
    $region10: #{tpu_custom_call.1} parent=1 // pred_check
      _
    $region11: #{tpu_custom_call.1} parent=1 // pred_check_branch
      %14 = sbr.rel (0) target = $region13
    $region12: #{tpu_custom_call.1} parent=1 // pred_region
      _
    $region13: #{tpu_custom_call.1} parent=1 // pred_fallthru
      _
    %v15 = vld [vmem:[%s0] sm:$0xff]
    %v16 = vld [vmem:[%s0 + $0x8] sm:$0xff]
    %v17 = vadd.f32 %v15, %v16
    %v18 = vrot.slane %v17, 4
    %v19 = vadd.f32 %v17, %v18
    %v20 = vrot.slane %v19, 2
    %v21 = vadd.f32 %v19, %v20
    %v22 = vrot.slane %v21, 1
    %v23 = vadd.f32 %v21, %v22
    %v24 = vrcp.pop 16.0
    %v25 = vmul.f32 %v23, %v24
    %v26 = vsub.f32 %v15, %v25
    %v27 = vsub.f32 %v16, %v25
    %v28 = vmul.f32 %v26, %v26
    %v29 = vmul.f32 %v27, %v27
    %v30 = vadd.f32 %v28, %v29
    %v31 = vrot.slane %v30, 4
    %v32 = vadd.f32 %v30, %v31
    %v33 = vrot.slane %v32, 2
    %v34 = vadd.f32 %v32, %v33
    %v35 = vrot.slane %v34, 1
    %v36 = vadd.f32 %v34, %v35
    %v37 = vmul.f32 %v36, 0.06666667
    %v38 = vadd.f32 %v37, 1e-05
    %v39 = vrsqrt.pop %v38
    %v40 = vmul.f32 %v38, %v39
    %vm41 = vcmp.eq.f32.partialorder %v38, inf
    %v42 = vsel %vm41, %v38, %v40
    %vm43 = vcmp.eq.f32.partialorder %v38, 0.0
    %v44 = vand.u32 %v38, 2147483648
    %v45 = vsel %vm43, %v44, %v42
    %v46 = vld [vmem:[%s1] sm:$0xff]
    %v47 = vld [vmem:[%s1 + $0x8] sm:$0xff]
    %v48 = vld [vmem:[%s1 + $0x10] sm:$0xff]
    %v49 = vld [vmem:[%s2] sm:$0xff]
    %v50 = vld [vmem:[%s2 + $0x8] sm:$0xff]
    %v51 = vld [vmem:[%s2 + $0x10] sm:$0xff]
    %53 = vset.pattern.permute.xlu0 0
    %54 = vperm.xlu0 %53, %v49
    %v55 = vpop.permute.xlu0 %54
    %58 = vset.pattern.permute.xlu0 0
    %59 = vperm.xlu0 %58, %v50
    %v60 = vpop.permute.xlu0 %59
    %63 = vset.pattern.permute.xlu0 0
    %64 = vperm.xlu0 %63, %v51
    %v65 = vpop.permute.xlu0 %64
    %v67 = vmul.f32 %v55, %v45
    %v68 = vmul.f32 %v60, %v45
    %v69 = vmul.f32 %v65, %v45
    %vm70 = vcmask 130048
    %v72 = vsel %vm70, %v46, 0
    %v75 = vsel %vm70, %v47, 0
    %v78 = vsel %vm70, %v48, 0
    %80 = vmatprep.subr.mxu0 0.0
    %81 = vmatpush1.msra.mxu0 %v26
    %82 = vmatprep.subr.mxu0 0.0
    %83 = vmatpush1.msra.mxu0 %v27
    %84 = vmatprep.subr.mxu0 0.0
    %85 = vmatpush1.msra.mxu0 0.0
    %86 = vmatprep.subr.mxu0 0.0
    %87 = vmatpush1.msra.mxu0 0.0
    %88 = vmatprep.subr.mxu0 0.0
    %89 = vmatpush1.msra.mxu0 0.0
    %90 = vmatprep.subr.mxu0 0.0
    %91 = vmatpush1.msra.mxu0 0.0
    %92 = vmatprep.subr.mxu0 0.0
    %93 = vmatpush1.msra.mxu0 0.0
    %94 = vmatprep.subr.mxu0 0.0
    %95 = vmatpush1.msra.mxu0 0.0
    %96 = vmatprep.subr.mxu0 0.0
    %97 = vmatpush1.msra.mxu0 0.0
    %98 = vmatprep.subr.mxu0 0.0
    %99 = vmatpush1.msra.mxu0 0.0
    %100 = vmatprep.subr.mxu0 0.0
    %101 = vmatpush1.msra.mxu0 0.0
    %102 = vmatprep.subr.mxu0 0.0
    %103 = vmatpush1.msra.mxu0 0.0
    %104 = vmatprep.subr.mxu0 0.0
    %105 = vmatpush1.msra.mxu0 0.0
    %106 = vmatprep.subr.mxu0 0.0
    %107 = vmatpush1.msra.mxu0 0.0
    %108 = vmatprep.subr.mxu0 0.0
    %109 = vmatpush1.msra.mxu0 0.0
    %110 = vmatprep.subr.mxu0 0.0
    %111 = vmatpush1.msra.mxu0 0.0
    %112 = vmatprep.subr.mxu0 0.0
    %113 = vmatpush1.msra.mxu0 0.0
    %114 = vmatprep.subr.mxu0 0.0
    %115 = vmatpush1.msra.mxu0 0.0
    %116 = vmatprep.subr.mxu0 0.0
    %117 = vmatpush1.msra.mxu0 0.0
    %118 = vmatprep.subr.mxu0 0.0
    %119 = vmatpush1.msra.mxu0 0.0
    %120 = vmatprep.subr.mxu0 0.0
    %121 = vmatpush1.msra.mxu0 0.0
    %122 = vmatprep.subr.mxu0 0.0
    %123 = vmatpush1.msra.mxu0 0.0
    %124 = vmatprep.subr.mxu0 0.0
    %125 = vmatpush1.msra.mxu0 0.0
    %126 = vmatprep.subr.mxu0 0.0
    %127 = vmatpush1.msra.mxu0 0.0
    %128 = vmatprep.subr.mxu0 0.0
    %129 = vmatpush1.msra.mxu0 0.0
    %130 = vmatprep.subr.mxu0 0.0
    %131 = vmatpush1.msra.mxu0 0.0
    %132 = vmatprep.subr.mxu0 0.0
    %133 = vmatpush1.msra.mxu0 0.0
    %134 = vmatprep.subr.mxu0 0.0
    %135 = vmatpush1.msra.mxu0 0.0
    %136 = vmatprep.subr.mxu0 0.0
    %137 = vmatpush1.msra.mxu0 0.0
    %138 = vmatprep.subr.mxu0 0.0
    %139 = vmatpush1.msra.mxu0 0.0
    %140 = vmatprep.subr.mxu0 0.0
    %141 = vmatpush1.msra.mxu0 0.0
    %142 = vmatprep.subr.mxu0 0.0
    %143 = vmatpush1.msra.mxu0 0.0
    %144 = vmatprep.mubr.f32.mxu0 0.0
    %145 = vmatmul.mubr.f32.gmra.mrb[0].mxu0 %v72
    %v146 = vpop.f32.mrb[0].mxu0
    %v147 = vadd.f32 %v67, %v146
    %v148 = vpop.f32.mrb[0].mxu0
    %149 = vmatprep.mubr.f32.mxu0 0.0
    %150 = vmatmul.mubr.f32.gmra.mrb[0].mxu0 %v75
    %v151 = vpop.f32.mrb[0].mxu0
    %v152 = vadd.f32 %v68, %v151
    %v153 = vpop.f32.mrb[0].mxu0
    %154 = vmatprep.mubr.f32.mxu0 0.0
    %155 = vmatmul.mubr.f32.gmra.mrb[0].mxu0 %v78
    %v156 = vpop.f32.mrb[0].mxu0
    %v157 = vadd.f32 %v69, %v156
    %v158 = vpop.f32.mrb[0].mxu0
    %159 = vdwg.mxu0
    %v160 = vadd.f32 %v147, %v25
    %v161 = vadd.f32 %v152, %v25
    %v162 = vadd.f32 %v157, %v25
    %163 = vst [vmem:[#allocation2] sm:$0xff] %v160
    %164 = vst [vmem:[#allocation2 + $0x8] sm:$0xff] %v161
    %165 = vst [vmem:[#allocation2 + $0x10] sm:$0xff] %v162
    // Predicated region
    $region14: #{tpu_custom_call.1} parent=1 // pred_check
      _
    $region15: #{tpu_custom_call.1} parent=1 // pred_check_branch
      %167 = sbr.rel (0) target = $region17
    $region16: #{tpu_custom_call.1} parent=1 // pred_region
      %s169 = ssub.s32 384, 384
      %170 = vsyncadd [#allocation3], %s169
      %s171 = sshll.u32 [#allocation2], 4
      %s172 = int_to_ptr.vmem [resolvable:$true] %s171
      %177 = dma.vmem_to_hbm [thread:$0]  %s172, 384, %s3, [#allocation3], 128, 128, 8
    $region17: #{tpu_custom_call.1} parent=1 // pred_fallthru
      _
    // Predicated region
    $region18: #{tpu_custom_call.1} parent=1 // pred_check
      _
    $region19: #{tpu_custom_call.1} parent=1 // pred_check_branch
      %179 = sbr.rel (0) target = $region21
    $region20: #{tpu_custom_call.1} parent=1 // pred_region
      %180 = dma.done [#allocation3], 384
    $region21: #{tpu_custom_call.1} parent=1 // pred_fallthru
      _
    %181 = vsyncpa [#allocation3], 1

</llo_original>
